<compile_context>
chip_gen: v5e
topology: v5e:2x2
jax: 0.10.0
libtpu: 0.0.40
codegen_flags: <defaults>
</compile_context>

<pallas_src>
import jax
import jax.numpy as jnp
from jax.experimental import pallas as pl
from jax.experimental.pallas import tpu as pltpu


def _round_up(x, m):
    return (x + m - 1) // m * m


def _tpu_info():
    try:
        return pltpu.get_tpu_info()
    except Exception:
        return None


def _vmem_capacity_bytes():
    info = _tpu_info()
    cap = getattr(info, "vmem_capacity_bytes", None) if info is not None else None
    try:
        cap = int(cap) if cap else 0
    except Exception:
        cap = 0
    # Conservative fallback: safe on every generation (v7x has 64 MiB per TC).
    return cap if cap > 0 else 64 * 2**20


def _mxu_pad_gran():
    # v6e/v7x MXUs are 256-wide: pad large feature dims to 256 so K/N tiles fill
    # the systolic array.  v5e (128-wide MXU) / unknown chips stay at 128.
    info = _tpu_info()
    if info is None:
        return 128
    tag = " ".join(
        str(getattr(info, a, "") or "")
        for a in ("chip_version", "device_kind", "name")
    ).lower()
    return 256 if any(t in tag for t in ("v6", "v7", "trillium")) else 128


def _feat_pad(n, gran):
    # Lane dims must be multiples of 128; wider dims padded to the MXU width.
    return _round_up(n, 128) if n <= 128 else _round_up(n, gran)


def _const_spec(shape, index_map):
    """Constant-index block (never re-fetched): request a single VMEM buffer."""
    try:
        return pl.BlockSpec(shape, index_map, pipeline_mode=pl.Buffered(1))
    except TypeError:  # older jax without pipeline_mode on BlockSpec
        return pl.BlockSpec(shape, index_map)


# ----------------------------------------------------------------------------
# Kernels
# ----------------------------------------------------------------------------

def _mlp_kernel_resident(x_ref, w1_ref, b1_ref, w2_ref, b2_ref, w3_ref, b3_ref,
                         o_ref):
    cdt = w1_ref.dtype  # matmul-input dtype; accumulation / bias / ReLU stay f32
    h1 = jnp.dot(x_ref[...], w1_ref[...], preferred_element_type=jnp.float32)
    h1 = jnp.maximum(h1 + b1_ref[...], 0.0).astype(cdt)
    h2 = jnp.dot(h1, w2_ref[...], preferred_element_type=jnp.float32)
    h2 = jnp.maximum(h2 + b2_ref[...], 0.0).astype(cdt)
    h3 = jnp.dot(h2, w3_ref[...], preferred_element_type=jnp.float32) + b3_ref[...]
    o_ref[...] = h3.astype(o_ref.dtype)


def _mlp_kernel_htiled(x_ref, w1_ref, b1_ref, w2_ref, b2_ref, w3_ref, b3_ref,
                       o_ref, acc_ref):
    # grid = (batch tiles ["parallel"], hidden chunks ["arbitrary"])
    k = pl.program_id(1)
    cdt = w1_ref.dtype

    @pl.when(k == 0)
    def _():
        acc_ref[...] = jnp.zeros_like(acc_ref)

    # layer1 chunk (+ ReLU), then accumulate its layer2 contribution.
    h1 = jnp.dot(x_ref[...], w1_ref[...], preferred_element_type=jnp.float32)
    h1 = jnp.maximum(h1 + b1_ref[...], 0.0).astype(cdt)
    acc_ref[...] += jnp.dot(h1, w2_ref[...], preferred_element_type=jnp.float32)

    @pl.when(k == pl.num_programs(1) - 1)
    def _():
        h2 = jnp.maximum(acc_ref[...] + b2_ref[...], 0.0).astype(cdt)
        h3 = jnp.dot(h2, w3_ref[...], preferred_element_type=jnp.float32) + b3_ref[...]
        o_ref[...] = h3.astype(o_ref.dtype)


# ----------------------------------------------------------------------------
# Wrapper
# ----------------------------------------------------------------------------

def mlp_forward(x, params, *, tile_b=512, compute_dtype=jnp.float32,
                force_hidden_tiling=False, hidden_tile=None):
    """x: [B, input_size] f32.  params: dict of (w, b); w is [in, out], b is [1, out]."""
    w1, b1 = params["layer1"]
    w2, b2 = params["layer2"]
    w3, b3 = params["layer3"]
    B, in_size = x.shape
    hidden, mid, num_classes = w1.shape[1], w2.shape[1], w3.shape[1]

    gran = _mxu_pad_gran()
    in_p = _feat_pad(in_size, gran)
    h_p = _feat_pad(hidden, gran)
    m_p = _feat_pad(mid, gran)
    nc_p = _feat_pad(num_classes, gran)

    ibytes = jnp.dtype(compute_dtype).itemsize
    sub = max(8, 32 // ibytes)  # 8 rows for f32, 16 for bf16 (native sublane tile)

    # Batch tile: sublane-granular; >=2 grid steps when the batch allows so the
    # "parallel" axis can shard across both v7x TensorCores.
    b_sub = _round_up(B, sub)
    tb = _round_up(min(tile_b, b_sub), sub)
    if b_sub // tb < 2 and b_sub >= 2 * sub:
        tb = _round_up((b_sub + 1) // 2, sub)
    tb0 = tb

    vmem_cap = _vmem_capacity_bytes()
    vmem_limit = int(0.85 * vmem_cap)    # declared budget (headroom for Mosaic scratch)
    soft_budget = int(0.70 * vmem_cap)   # target for tiling decisions

    def resident_need(tb_):
        return int(
            2 * tb_ * in_p * ibytes                            # x double buffer
            + 2 * tb_ * nc_p * 4                               # out double buffer
            + (in_p * h_p + h_p * m_p + m_p * nc_p) * ibytes   # resident weights (1 buf)
            + (h_p + m_p + nc_p) * 4                           # resident biases
            + tb_ * (h_p + m_p + nc_p) * 4                     # f32 intermediates
            + tb_ * (h_p + m_p) * ibytes                       # low-precision h1/h2 copies
        )

    def tiled_need(tb_, th_):
        return int(
            2 * tb_ * in_p * ibytes
            + 2 * tb_ * nc_p * 4
            + 2 * (in_p * th_ + th_ * m_p) * ibytes + 2 * th_ * 4  # streamed w1/b1/w2 chunks
            + (m_p * nc_p) * ibytes + (m_p + nc_p) * 4             # resident w3/b2/b3
            + tb_ * m_p * 4                                        # f32 accumulator scratch
            + tb_ * (th_ + m_p + nc_p) * 4                         # f32 intermediates
            + tb_ * (th_ + m_p) * ibytes                           # cast copies
        )

    use_tiled = bool(force_hidden_tiling)
    if not use_tiled:
        while resident_need(tb) > soft_budget and tb > 2 * sub:
            tb = max(sub, _round_up(tb // 2, sub))
        use_tiled = resident_need(tb) > soft_budget

    if use_tiled:
        tb = tb0
        cands = [c for c in (8192, 4096, 2048, 1024, 512, 256, 128) if c <= max(h_p, 128)]
        if hidden_tile is not None:
            th = max(128, _round_up(int(hidden_tile), 128))
        else:
            th = cands[-1]
            for c in cands:
                if tiled_need(tb, c) <= soft_budget:
                    th = c
                    break
        while tiled_need(tb, th) > soft_budget and tb > 2 * sub:
            tb = max(sub, _round_up(tb // 2, sub))
        # TODO(synk): if even (tb=sublane, th=128) overflows VMEM (enormous mid or
        # num_classes), the mid dim would need tiling too; not implemented here.
        h_p = _round_up(h_p, th)
    else:
        th = h_p

    b_p = _round_up(b_sub, tb)
    grid_b = b_p // tb
    grid_h = h_p // th

    pad2 = lambda a, r, c: jnp.pad(a, ((0, r - a.shape[0]), (0, c - a.shape[1])))

    xp = pad2(x, b_p, in_p).astype(compute_dtype)
    w1p = pad2(w1, in_p, h_p).astype(compute_dtype)
    w2p = pad2(w2, h_p, m_p).astype(compute_dtype)
    w3p = pad2(w3, m_p, nc_p).astype(compute_dtype)
    # Biases stay f32: bias add + ReLU run in f32 on the VPU.
    b1p = pad2(b1, 1, h_p).astype(jnp.float32)
    b2p = pad2(b2, 1, m_p).astype(jnp.float32)
    b3p = pad2(b3, 1, nc_p).astype(jnp.float32)

    flops = 2 * b_p * (in_p * h_p + h_p * m_p + m_p * nc_p)
    io_bytes = xp.size * ibytes + b_p * nc_p * 4

    if not use_tiled:
        cost = pl.CostEstimate(
            flops=flops, transcendentals=0,
            bytes_accessed=io_bytes
            + (w1p.size + w2p.size + w3p.size) * ibytes
            + (b1p.size + b2p.size + b3p.size) * 4,
        )
        out_p = pl.pallas_call(
            _mlp_kernel_resident,
            out_shape=jax.ShapeDtypeStruct((b_p, nc_p), jnp.float32),
            grid=(grid_b,),
            in_specs=[
                pl.BlockSpec((tb, in_p), lambda i: (i, 0)),      # x tile, pipelined over batch
                _const_spec(w1p.shape, lambda i: (0, 0)),        # weights/biases: 1 VMEM buffer
                _const_spec(b1p.shape, lambda i: (0, 0)),
                _const_spec(w2p.shape, lambda i: (0, 0)),
                _const_spec(b2p.shape, lambda i: (0, 0)),
                _const_spec(w3p.shape, lambda i: (0, 0)),
                _const_spec(b3p.shape, lambda i: (0, 0)),
            ],
            out_specs=pl.BlockSpec((tb, nc_p), lambda i: (i, 0)),  # lane-dense output tile
            compiler_params=pltpu.CompilerParams(
                dimension_semantics=("parallel",),
                vmem_limit_bytes=vmem_limit,
            ),
            cost_estimate=cost,
        )(xp, w1p, b1p, w2p, b2p, w3p, b3p)
    else:
        # w1/b1/w2 are re-streamed once per batch step (hidden axis is innermost).
        cost = pl.CostEstimate(
            flops=flops, transcendentals=0,
            bytes_accessed=io_bytes
            + grid_b * ((w1p.size + w2p.size) * ibytes + b1p.size * 4)
            + w3p.size * ibytes + (b2p.size + b3p.size) * 4,
        )
        out_p = pl.pallas_call(
            _mlp_kernel_htiled,
            out_shape=jax.ShapeDtypeStruct((b_p, nc_p), jnp.float32),
            grid=(grid_b, grid_h),
            in_specs=[
                pl.BlockSpec((tb, in_p), lambda i, k: (i, 0)),   # revisited across k (no re-DMA)
                pl.BlockSpec((in_p, th), lambda i, k: (0, k)),   # w1 N-chunk (streamed)
                pl.BlockSpec((1, th), lambda i, k: (0, k)),      # b1 chunk
                pl.BlockSpec((th, m_p), lambda i, k: (k, 0)),    # w2 K-chunk (streamed)
                _const_spec(b2p.shape, lambda i, k: (0, 0)),
                _const_spec(w3p.shape, lambda i, k: (0, 0)),
                _const_spec(b3p.shape, lambda i, k: (0, 0)),
            ],
            out_specs=pl.BlockSpec((tb, nc_p), lambda i, k: (i, 0)),
            scratch_shapes=[pltpu.VMEM((tb, m_p), jnp.float32)],
            compiler_params=pltpu.CompilerParams(
                dimension_semantics=("parallel", "arbitrary"),
                vmem_limit_bytes=vmem_limit,
            ),
            cost_estimate=cost,
        )(xp, w1p, b1p, w2p, b2p, w3p, b3p)

    # Slice padding back off (padded weight/bias columns are exactly zero).
    return out_p[:B, :num_classes]


# ----------------------------------------------------------------------------
# Parameter init + reference
# ----------------------------------------------------------------------------

def init_params(key, input_size, hidden_size, num_classes):
    """Deterministic parameter init mirroring the shapes of the PyTorch module."""
    mid_size = int(hidden_size / 3)
    dims = [(input_size, hidden_size), (hidden_size, mid_size), (mid_size, num_classes)]
    names = ["layer1", "layer2", "layer3"]
    params = {}
    for name, (fan_in, fan_out) in zip(names, dims):
        key, kw, kb = jax.random.split(key, 3)
        bound = 1.0 / (fan_in ** 0.5)
        # stored as [in, out] (transpose of torch's [out, in]); bias kept 2-D [1, out]
        w = jax.random.uniform(kw, (fan_in, fan_out), jnp.float32, -bound, bound)
        b = jax.random.uniform(kb, (1, fan_out), jnp.float32, -bound, bound)
        params[name] = (w, b)
    return params


def mlp_reference(x, params, compute_dtype=jnp.float32):
    h = x.astype(compute_dtype)
    for name in ("layer1", "layer2", "layer3"):
        w, b = params[name]
        h = jnp.dot(h, w.astype(compute_dtype), preferred_element_type=jnp.float32) + b
        if name != "layer3":
            h = jnp.maximum(h, 0.0).astype(compute_dtype)
    return h


if __name__ == "__main__":
    # NOTE: demo sizes are fixed-overhead / padding bound; tune at B>=1024,
    # hidden>=1024 for real performance numbers.
    input_size, hidden_size, num_classes = 32, 48, 10  # hidden/3 = 16
    batch = 8

    key = jax.random.PRNGKey(0)
    key, kx = jax.random.split(key)
    x = jax.random.normal(kx, (batch, input_size), jnp.float32)
    params = init_params(key, input_size, hidden_size, num_classes)

    # 1) f32 matmul inputs, weight-resident path: tight tolerance.
    out = jax.block_until_ready(mlp_forward(x, params, compute_dtype=jnp.float32))
    ref = mlp_reference(x, params, jnp.float32)
    assert out.shape == (batch, num_classes)
    assert jnp.allclose(out, ref, atol=1e-5, rtol=1e-5)

    # 2) bf16 matmul inputs (v6e/v7x fast path): loose tolerance vs identically-cast ref.
    out_bf = jax.block_until_ready(mlp_forward(x, params, compute_dtype=jnp.bfloat16))
    ref_bf = mlp_reference(x, params, jnp.bfloat16)
    assert jnp.allclose(out_bf, ref_bf, atol=5e-2, rtol=5e-2)

    # 3) Hidden-tiled fallback path (v7x large-model plan), exercised with a forced
    #    small hidden tile so multiple accumulation steps run.
    in2, hid2, nc2, b2_ = 64, 300, 10, 64
    key, kx2 = jax.random.split(key)
    x2 = jax.random.normal(kx2, (b2_, in2), jnp.float32)
    params2 = init_params(key, in2, hid2, nc2)
    out_t = jax.block_until_ready(
        mlp_forward(x2, params2, compute_dtype=jnp.float32,
                    force_hidden_tiling=True, hidden_tile=128))
    ref_t = mlp_reference(x2, params2, jnp.float32)
    assert out_t.shape == (b2_, nc2)
    assert jnp.allclose(out_t, ref_t, atol=1e-4, rtol=1e-4)

    print("KERNEL_OK")
</pallas_src>

<mosaic_0001>
module attributes {stable_mosaic.version = 11 : i64} {
  func.func @_mlp_kernel_resident(%arg0: i32, %arg1: memref<8x128xf32, #tpu.memory_space<vmem>>, %arg2: memref<128x128xf32, #tpu.memory_space<vmem>>, %arg3: memref<1x128xf32, #tpu.memory_space<vmem>>, %arg4: memref<128x128xf32, #tpu.memory_space<vmem>>, %arg5: memref<1x128xf32, #tpu.memory_space<vmem>>, %arg6: memref<128x128xf32, #tpu.memory_space<vmem>>, %arg7: memref<1x128xf32, #tpu.memory_space<vmem>>, %arg8: memref<8x128xf32, #tpu.memory_space<vmem>>) attributes {dimension_semantics = [#tpu.dimension_semantics<parallel>], iteration_bounds = array<i64: 1>, scalar_prefetch = 0 : i64, scratch_operands = 0 : i64, tpu.core_type = #tpu.core_type<tc>, window_params = [{transform_indices = @transform_0, window_bounds = array<i64: 8, 128>}, {pipeline_mode = #tpu.pipeline_mode<synchronous>, transform_indices = @transform_1, window_bounds = array<i64: 128, 128>}, {pipeline_mode = #tpu.pipeline_mode<synchronous>, transform_indices = @transform_2, window_bounds = array<i64: 1, 128>}, {pipeline_mode = #tpu.pipeline_mode<synchronous>, transform_indices = @transform_3, window_bounds = array<i64: 128, 128>}, {pipeline_mode = #tpu.pipeline_mode<synchronous>, transform_indices = @transform_4, window_bounds = array<i64: 1, 128>}, {pipeline_mode = #tpu.pipeline_mode<synchronous>, transform_indices = @transform_5, window_bounds = array<i64: 128, 128>}, {pipeline_mode = #tpu.pipeline_mode<synchronous>, transform_indices = @transform_6, window_bounds = array<i64: 1, 128>}, {transform_indices = @transform_7, window_bounds = array<i64: 8, 128>}]} {
    %c0 = arith.constant 0 : index
    %c0_0 = arith.constant 0 : index
    %0 = vector.load %arg1[%c0, %c0_0] : memref<8x128xf32, #tpu.memory_space<vmem>>, vector<8x128xf32>
    %c0_1 = arith.constant 0 : index
    %c0_2 = arith.constant 0 : index
    %1 = vector.load %arg2[%c0_1, %c0_2] : memref<128x128xf32, #tpu.memory_space<vmem>>, vector<128x128xf32>
    %cst = arith.constant dense<0.000000e+00> : vector<8x128xf32>
    %2 = tpu.matmul %0, %1, %cst {dimension_numbers = #tpu.dot_dimension_numbers<[1], [0], [0], [1], [0, 0, 1, 1], [], []>} : vector<8x128xf32>, vector<128x128xf32>, vector<8x128xf32> -> vector<8x128xf32>
    %c0_3 = arith.constant 0 : index
    %c0_4 = arith.constant 0 : index
    %3 = vector.load %arg3[%c0_3, %c0_4] : memref<1x128xf32, #tpu.memory_space<vmem>>, vector<1x128xf32>
    %4 = vector.broadcast %3 : vector<1x128xf32> to vector<8x128xf32>
    %5 = arith.addf %2, %4 : vector<8x128xf32>
    %cst_5 = arith.constant 0.000000e+00 : f32
    %6 = vector.broadcast %cst_5 : f32 to vector<8x128xf32>
    %7 = arith.maximumf %5, %6 : vector<8x128xf32>
    %c0_6 = arith.constant 0 : index
    %c0_7 = arith.constant 0 : index
    %8 = vector.load %arg4[%c0_6, %c0_7] : memref<128x128xf32, #tpu.memory_space<vmem>>, vector<128x128xf32>
    %cst_8 = arith.constant dense<0.000000e+00> : vector<8x128xf32>
    %9 = tpu.matmul %7, %8, %cst_8 {dimension_numbers = #tpu.dot_dimension_numbers<[1], [0], [0], [1], [0, 0, 1, 1], [], []>} : vector<8x128xf32>, vector<128x128xf32>, vector<8x128xf32> -> vector<8x128xf32>
    %c0_9 = arith.constant 0 : index
    %c0_10 = arith.constant 0 : index
    %10 = vector.load %arg5[%c0_9, %c0_10] : memref<1x128xf32, #tpu.memory_space<vmem>>, vector<1x128xf32>
    %11 = vector.broadcast %10 : vector<1x128xf32> to vector<8x128xf32>
    %12 = arith.addf %9, %11 : vector<8x128xf32>
    %cst_11 = arith.constant 0.000000e+00 : f32
    %13 = vector.broadcast %cst_11 : f32 to vector<8x128xf32>
    %14 = arith.maximumf %12, %13 : vector<8x128xf32>
    %c0_12 = arith.constant 0 : index
    %c0_13 = arith.constant 0 : index
    %15 = vector.load %arg6[%c0_12, %c0_13] : memref<128x128xf32, #tpu.memory_space<vmem>>, vector<128x128xf32>
    %cst_14 = arith.constant dense<0.000000e+00> : vector<8x128xf32>
    %16 = tpu.matmul %14, %15, %cst_14 {dimension_numbers = #tpu.dot_dimension_numbers<[1], [0], [0], [1], [0, 0, 1, 1], [], []>} : vector<8x128xf32>, vector<128x128xf32>, vector<8x128xf32> -> vector<8x128xf32>
    %c0_15 = arith.constant 0 : index
    %c0_16 = arith.constant 0 : index
    %17 = vector.load %arg7[%c0_15, %c0_16] : memref<1x128xf32, #tpu.memory_space<vmem>>, vector<1x128xf32>
    %18 = vector.broadcast %17 : vector<1x128xf32> to vector<8x128xf32>
    %19 = arith.addf %16, %18 : vector<8x128xf32>
    %c0_17 = arith.constant 0 : index
    %c0_18 = arith.constant 0 : index
    %20 = vector.load %arg8[%c0_17, %c0_18] : memref<8x128xf32, #tpu.memory_space<vmem>>, vector<8x128xf32>
    tpu.vector_store %arg8[%c0_17, %c0_18], %19 {strides = array<i32>} : memref<8x128xf32, #tpu.memory_space<vmem>>, vector<8x128xf32>,
    return
  }
  func.func @transform_0(%arg0: i32) -> (i32, i32) {
    %c0_i32 = arith.constant 0 : i32
    %c0_i32_0 = arith.constant 0 : i32
    return %arg0, %c0_i32 : i32, i32
  }
  func.func @transform_1(%arg0: i32) -> (i32, i32) {
    %c0_i32 = arith.constant 0 : i32
    %c0_i32_0 = arith.constant 0 : i32
    %c0_i32_1 = arith.constant 0 : i32
    return %c0_i32, %c0_i32_0 : i32, i32
  }
  func.func @transform_2(%arg0: i32) -> (i32, i32) {
    %c0_i32 = arith.constant 0 : i32
    %c0_i32_0 = arith.constant 0 : i32
    %c0_i32_1 = arith.constant 0 : i32
    return %c0_i32, %c0_i32_0 : i32, i32
  }
  func.func @transform_3(%arg0: i32) -> (i32, i32) {
    %c0_i32 = arith.constant 0 : i32
    %c0_i32_0 = arith.constant 0 : i32
    %c0_i32_1 = arith.constant 0 : i32
    return %c0_i32, %c0_i32_0 : i32, i32
  }
  func.func @transform_4(%arg0: i32) -> (i32, i32) {
    %c0_i32 = arith.constant 0 : i32
    %c0_i32_0 = arith.constant 0 : i32
    %c0_i32_1 = arith.constant 0 : i32
    return %c0_i32, %c0_i32_0 : i32, i32
  }
  func.func @transform_5(%arg0: i32) -> (i32, i32) {
    %c0_i32 = arith.constant 0 : i32
    %c0_i32_0 = arith.constant 0 : i32
    %c0_i32_1 = arith.constant 0 : i32
    return %c0_i32, %c0_i32_0 : i32, i32
  }
  func.func @transform_6(%arg0: i32) -> (i32, i32) {
    %c0_i32 = arith.constant 0 : i32
    %c0_i32_0 = arith.constant 0 : i32
    %c0_i32_1 = arith.constant 0 : i32
    return %c0_i32, %c0_i32_0 : i32, i32
  }
  func.func @transform_7(%arg0: i32) -> (i32, i32) {
    %c0_i32 = arith.constant 0 : i32
    %c0_i32_0 = arith.constant 0 : i32
    return %arg0, %c0_i32 : i32, i32
  }
}

</mosaic_0001>

<llo_original>
// kernel: tpu_custom_call.1
$region0: #{tpu_custom_call.1}
  #allocation0 [shape = 'u32[]', space=smem, size = 0x4, offset = 0x4, fixed_abs, tag = 'smem constant byte address 0x4 - core index']
  #allocation1 [shape = 'u32[72,128]{1,0:T(1,128)}', space=vmem, size = 0x9000, scoped, tag = 'internal scratch']
  %s0 = inlined_call_operand.hbm [shape: f32[8,128], index: 0, kind: input, shape index: {}]
  %s1 = inlined_call_operand.hbm [shape: f32[128,128], index: 1, kind: input, shape index: {}]
  %s2 = inlined_call_operand.vmem [shape: f32[1,128], index: 2, kind: input, shape index: {}]
  %s3 = inlined_call_operand.hbm [shape: f32[128,128], index: 3, kind: input, shape index: {}]
  %s4 = inlined_call_operand.vmem [shape: f32[1,128], index: 4, kind: input, shape index: {}]
  %s5 = inlined_call_operand.hbm [shape: f32[128,128], index: 5, kind: input, shape index: {}]
  %s6 = inlined_call_operand.vmem [shape: f32[1,128], index: 6, kind: input, shape index: {}]
  %s7 = inlined_call_operand.hbm [shape: f32[8,128], index: 7, kind: output, shape index: {}]
  %s8 = sld [smem:[#allocation0]]
  $region54: #{tpu_custom_call.1} parent=0
    _
  %s10 = ssub.s32 1, %s8
  %s11 = scalar_select 0, %s10, %s8
  $region1: #{tpu_custom_call.1} parent=0
    #allocation2 [shape = 'u8[4096]{0}', space=vmem, size = 0x1000, scoped, tag = 'input window, operand 0, single buffered']
    #allocation3 [shape = 's32[1]{0}', space=sflag, size = 0x4, scoped, tag = 'scoped memory for tpu_custom_call.1']
    #allocation4 [shape = 's32[1]{0}', space=sflag, size = 0x4, scoped, tag = 'scoped memory for tpu_custom_call.1']
    #allocation5 [shape = 'u8[65536]{0}', space=vmem, size = 0x10000, scoped, tag = 'input window, operand 1, single buffered']
    #allocation6 [shape = 's32[1]{0}', space=sflag, size = 0x4, scoped, tag = 'scoped memory for tpu_custom_call.1']
    #allocation7 [shape = 'u8[65536]{0}', space=vmem, size = 0x10000, scoped, tag = 'input window, operand 3, single buffered']
    #allocation8 [shape = 'u8[65536]{0}', space=vmem, size = 0x10000, scoped, tag = 'input window, operand 5, single buffered']
    #allocation9 [shape = 's32[1]{0}', space=sflag, size = 0x4, scoped, tag = 'scoped memory for tpu_custom_call.1']
    #allocation10 [shape = 'u8[4096]{0}', space=vmem, size = 0x1000, scoped, tag = 'output window, operand 0, single buffered']
    %12 = vsyncpa [#allocation3], 0
    %13 = vsyncpa [#allocation6], 0
    %14 = vsyncpa [#allocation9], 0
    %15 = vsyncpa [#allocation4], 0
    // Predicated region
    $region2: #{tpu_custom_call.1} parent=1 // pred_check
      _
    $region3: #{tpu_custom_call.1} parent=1 // pred_check_branch
      %17 = sbr.rel (0) target = $region5
    $region4: #{tpu_custom_call.1} parent=1 // pred_region
      %19 = vsyncadd [#allocation3], 0
      %s21 = sshll.u32 %s0, 4
      %s22 = int_to_ptr.hbm [resolvable:$true] %s21
      %s23 = sshll.u32 [#allocation2], 4
      %s24 = int_to_ptr.vmem [resolvable:$true] %s23
      %26 = dma.hbm_to_vmem [thread:$0]  %s22, 128, %s24, [#allocation3]
    $region5: #{tpu_custom_call.1} parent=1 // pred_fallthru
      _
    // Predicated region
    $region6: #{tpu_custom_call.1} parent=1 // pred_check
      _
    $region7: #{tpu_custom_call.1} parent=1 // pred_check_branch
      %28 = sbr.rel (0) target = $region9
    $region8: #{tpu_custom_call.1} parent=1 // pred_region
      %30 = vsyncadd [#allocation6], 0
      %s31 = sshll.u32 %s1, 4
      %s32 = int_to_ptr.hbm [resolvable:$true] %s31
      %s33 = sshll.u32 [#allocation5], 4
      %s34 = int_to_ptr.vmem [resolvable:$true] %s33
      %39 = dma.hbm_to_vmem [thread:$0]  %s32, 2048, %s34, [#allocation6], 128, 128, 8
    $region9: #{tpu_custom_call.1} parent=1 // pred_fallthru
      _
    // Predicated region
    $region10: #{tpu_custom_call.1} parent=1 // pred_check
      _
    $region11: #{tpu_custom_call.1} parent=1 // pred_check_branch
      %41 = sbr.rel (0) target = $region13
    $region12: #{tpu_custom_call.1} parent=1 // pred_region
      _
    $region13: #{tpu_custom_call.1} parent=1 // pred_fallthru
      _
    // Predicated region
    $region14: #{tpu_custom_call.1} parent=1 // pred_check
      _
    $region15: #{tpu_custom_call.1} parent=1 // pred_check_branch
      %43 = sbr.rel (0) target = $region17
    $region16: #{tpu_custom_call.1} parent=1 // pred_region
      %45 = vsyncadd [#allocation6], 0
      %s46 = sshll.u32 %s3, 4
      %s47 = int_to_ptr.hbm [resolvable:$true] %s46
      %s48 = sshll.u32 [#allocation7], 4
      %s49 = int_to_ptr.vmem [resolvable:$true] %s48
      %54 = dma.hbm_to_vmem [thread:$0]  %s47, 2048, %s49, [#allocation6], 128, 128, 8
    $region17: #{tpu_custom_call.1} parent=1 // pred_fallthru
      _
    // Predicated region
    $region18: #{tpu_custom_call.1} parent=1 // pred_check
      _
    $region19: #{tpu_custom_call.1} parent=1 // pred_check_branch
      %56 = sbr.rel (0) target = $region21
    $region20: #{tpu_custom_call.1} parent=1 // pred_region
      _
    $region21: #{tpu_custom_call.1} parent=1 // pred_fallthru
      _
    // Predicated region
    $region22: #{tpu_custom_call.1} parent=1 // pred_check
      _
    $region23: #{tpu_custom_call.1} parent=1 // pred_check_branch
      %58 = sbr.rel (0) target = $region25
    $region24: #{tpu_custom_call.1} parent=1 // pred_region
      %60 = vsyncadd [#allocation9], 0
      %s61 = sshll.u32 %s5, 4
      %s62 = int_to_ptr.hbm [resolvable:$true] %s61
      %s63 = sshll.u32 [#allocation8], 4
      %s64 = int_to_ptr.vmem [resolvable:$true] %s63
      %69 = dma.hbm_to_vmem [thread:$0]  %s62, 2048, %s64, [#allocation9], 128, 128, 8
    $region25: #{tpu_custom_call.1} parent=1 // pred_fallthru
      _
    // Predicated region
    $region26: #{tpu_custom_call.1} parent=1 // pred_check
      _
    $region27: #{tpu_custom_call.1} parent=1 // pred_check_branch
      %71 = sbr.rel (0) target = $region29
    $region28: #{tpu_custom_call.1} parent=1 // pred_region
      _
    $region29: #{tpu_custom_call.1} parent=1 // pred_fallthru
      _
    // Predicated region
    $region30: #{tpu_custom_call.1} parent=1 // pred_check
      _
    $region31: #{tpu_custom_call.1} parent=1 // pred_check_branch
      %73 = sbr.rel (0) target = $region33
    $region32: #{tpu_custom_call.1} parent=1 // pred_region
      %75 = dma.done [#allocation3], 128
    $region33: #{tpu_custom_call.1} parent=1 // pred_fallthru
      _
    // Predicated region
    $region34: #{tpu_custom_call.1} parent=1 // pred_check
      _
    $region35: #{tpu_custom_call.1} parent=1 // pred_check_branch
      %77 = sbr.rel (0) target = $region37
    $region36: #{tpu_custom_call.1} parent=1 // pred_region
      %79 = dma.done [#allocation6], 2048
    $region37: #{tpu_custom_call.1} parent=1 // pred_fallthru
      _
    // Predicated region
    $region38: #{tpu_custom_call.1} parent=1 // pred_check
      _
    $region39: #{tpu_custom_call.1} parent=1 // pred_check_branch
      %81 = sbr.rel (0) target = $region41
    $region40: #{tpu_custom_call.1} parent=1 // pred_region
      %83 = dma.done [#allocation6], 2048
    $region41: #{tpu_custom_call.1} parent=1 // pred_fallthru
      _
    // Predicated region
    $region42: #{tpu_custom_call.1} parent=1 // pred_check
      _
    $region43: #{tpu_custom_call.1} parent=1 // pred_check_branch
      %85 = sbr.rel (0) target = $region45
    $region44: #{tpu_custom_call.1} parent=1 // pred_region
      %87 = dma.done [#allocation9], 2048
    $region45: #{tpu_custom_call.1} parent=1 // pred_fallthru
      _
    %v88 = vld [vmem:[#allocation2] sm:$0xff]
    %v89 = vld [vmem:[#allocation5] sm:$0xff]
    %v90 = vld [vmem:[#allocation5 + $0x8] sm:$0xff]
    %v91 = vld [vmem:[#allocation5 + $0x10] sm:$0xff]
    %v92 = vld [vmem:[#allocation5 + $0x18] sm:$0xff]
    %v93 = vld [vmem:[#allocation5 + $0x20] sm:$0xff]
    %v94 = vld [vmem:[#allocation5 + $0x28] sm:$0xff]
    %v95 = vld [vmem:[#allocation5 + $0x30] sm:$0xff]
    %v96 = vld [vmem:[#allocation5 + $0x38] sm:$0xff]
    %v97 = vld [vmem:[#allocation5 + $0x40] sm:$0xff]
    %v98 = vld [vmem:[#allocation5 + $0x48] sm:$0xff]
    %v99 = vld [vmem:[#allocation5 + $0x50] sm:$0xff]
    %v100 = vld [vmem:[#allocation5 + $0x58] sm:$0xff]
    %v101 = vld [vmem:[#allocation5 + $0x60] sm:$0xff]
    %v102 = vld [vmem:[#allocation5 + $0x68] sm:$0xff]
    %v103 = vld [vmem:[#allocation5 + $0x70] sm:$0xff]
    %v104 = vld [vmem:[#allocation5 + $0x78] sm:$0xff]
    %v105 = vld [vmem:[%s2] sm:$0x1]
    %v107 = vperm.slane %v105, 0
    %109 = vmatpush.msra.mxu0 %v104
    %110 = vmatpush.msra.mxu0 %v103
    %111 = vmatpush.msra.mxu0 %v102
    %112 = vmatpush.msra.mxu0 %v101
    %113 = vmatpush.msra.mxu0 %v100
    %114 = vmatpush.msra.mxu0 %v99
    %115 = vmatpush.msra.mxu0 %v98
    %116 = vmatpush.msra.mxu0 %v97
    %117 = vmatpush.msra.mxu0 %v96
    %118 = vmatpush.msra.mxu0 %v95
    %119 = vmatpush.msra.mxu0 %v94
    %120 = vmatpush.msra.mxu0 %v93
    %121 = vmatpush.msra.mxu0 %v92
    %122 = vmatpush.msra.mxu0 %v91
    %123 = vmatpush.msra.mxu0 %v90
    %124 = vmatpush.msra.mxu0 %v89
    %125 = vmatmul.f32.gmra.mxu0 %v88
    %v126 = vpop.f32.mrf.mxu0
    %v127 = vadd.f32 %v107, %v126
    %128 = vdwg.mxu0
    %v129 = vmax.f32 %v127, 0.0
    %v130 = vld [vmem:[#allocation7] sm:$0xff]
    %v131 = vld [vmem:[#allocation7 + $0x8] sm:$0xff]
    %v132 = vld [vmem:[#allocation7 + $0x10] sm:$0xff]
    %v133 = vld [vmem:[#allocation7 + $0x18] sm:$0xff]
    %v134 = vld [vmem:[#allocation7 + $0x20] sm:$0xff]
    %v135 = vld [vmem:[#allocation7 + $0x28] sm:$0xff]
    %v136 = vld [vmem:[#allocation7 + $0x30] sm:$0xff]
    %v137 = vld [vmem:[#allocation7 + $0x38] sm:$0xff]
    %v138 = vld [vmem:[#allocation7 + $0x40] sm:$0xff]
    %v139 = vld [vmem:[#allocation7 + $0x48] sm:$0xff]
    %v140 = vld [vmem:[#allocation7 + $0x50] sm:$0xff]
    %v141 = vld [vmem:[#allocation7 + $0x58] sm:$0xff]
    %v142 = vld [vmem:[#allocation7 + $0x60] sm:$0xff]
    %v143 = vld [vmem:[#allocation7 + $0x68] sm:$0xff]
    %v144 = vld [vmem:[#allocation7 + $0x70] sm:$0xff]
    %v145 = vld [vmem:[#allocation7 + $0x78] sm:$0xff]
    %v146 = vld [vmem:[%s4] sm:$0x1]
    %v148 = vperm.slane %v146, 0
    %150 = vmatpush.msra.mxu0 %v145
    %151 = vmatpush.msra.mxu0 %v144
    %152 = vmatpush.msra.mxu0 %v143
    %153 = vmatpush.msra.mxu0 %v142
    %154 = vmatpush.msra.mxu0 %v141
    %155 = vmatpush.msra.mxu0 %v140
    %156 = vmatpush.msra.mxu0 %v139
    %157 = vmatpush.msra.mxu0 %v138
    %158 = vmatpush.msra.mxu0 %v137
    %159 = vmatpush.msra.mxu0 %v136
    %160 = vmatpush.msra.mxu0 %v135
    %161 = vmatpush.msra.mxu0 %v134
    %162 = vmatpush.msra.mxu0 %v133
    %163 = vmatpush.msra.mxu0 %v132
    %164 = vmatpush.msra.mxu0 %v131
    %165 = vmatpush.msra.mxu0 %v130
    %166 = vmatmul.f32.gmra.mxu0 %v129
    %v167 = vpop.f32.mrf.mxu0
    %v168 = vadd.f32 %v148, %v167
    %169 = vdwg.mxu0
    %v170 = vmax.f32 %v168, 0.0
    %v171 = vld [vmem:[#allocation8] sm:$0xff]
    %v172 = vld [vmem:[#allocation8 + $0x8] sm:$0xff]
    %v173 = vld [vmem:[#allocation8 + $0x10] sm:$0xff]
    %v174 = vld [vmem:[#allocation8 + $0x18] sm:$0xff]
    %v175 = vld [vmem:[#allocation8 + $0x20] sm:$0xff]
    %v176 = vld [vmem:[#allocation8 + $0x28] sm:$0xff]
    %v177 = vld [vmem:[#allocation8 + $0x30] sm:$0xff]
    %v178 = vld [vmem:[#allocation8 + $0x38] sm:$0xff]
    %v179 = vld [vmem:[#allocation8 + $0x40] sm:$0xff]
    %v180 = vld [vmem:[#allocation8 + $0x48] sm:$0xff]
    %v181 = vld [vmem:[#allocation8 + $0x50] sm:$0xff]
    %v182 = vld [vmem:[#allocation8 + $0x58] sm:$0xff]
    %v183 = vld [vmem:[#allocation8 + $0x60] sm:$0xff]
    %v184 = vld [vmem:[#allocation8 + $0x68] sm:$0xff]
    %v185 = vld [vmem:[#allocation8 + $0x70] sm:$0xff]
    %v186 = vld [vmem:[#allocation8 + $0x78] sm:$0xff]
    %v187 = vld [vmem:[%s6] sm:$0x1]
    %v189 = vperm.slane %v187, 0
    %191 = vmatpush.msra.mxu0 %v186
    %192 = vmatpush.msra.mxu0 %v185
    %193 = vmatpush.msra.mxu0 %v184
    %194 = vmatpush.msra.mxu0 %v183
    %195 = vmatpush.msra.mxu0 %v182
    %196 = vmatpush.msra.mxu0 %v181
    %197 = vmatpush.msra.mxu0 %v180
    %198 = vmatpush.msra.mxu0 %v179
    %199 = vmatpush.msra.mxu0 %v178
    %200 = vmatpush.msra.mxu0 %v177
    %201 = vmatpush.msra.mxu0 %v176
    %202 = vmatpush.msra.mxu0 %v175
    %203 = vmatpush.msra.mxu0 %v174
    %204 = vmatpush.msra.mxu0 %v173
    %205 = vmatpush.msra.mxu0 %v172
    %206 = vmatpush.msra.mxu0 %v171
    %207 = vmatmul.f32.gmra.mxu0 %v170
    %v208 = vpop.f32.mrf.mxu0
    %v209 = vadd.f32 %v189, %v208
    %210 = vdwg.mxu0
    %211 = vst [vmem:[#allocation10] sm:$0xff] %v209
    // Predicated region
    $region46: #{tpu_custom_call.1} parent=1 // pred_check
      _
    $region47: #{tpu_custom_call.1} parent=1 // pred_check_branch
      %213 = sbr.rel (0) target = $region49
    $region48: #{tpu_custom_call.1} parent=1 // pred_region
      %215 = vsyncadd [#allocation4], 0
      %s217 = sshll.u32 [#allocation10], 4
      %s218 = int_to_ptr.vmem [resolvable:$true] %s217
      %s219 = sshll.u32 %s7, 4
      %s220 = int_to_ptr.hbm [resolvable:$true] %s219
      %222 = dma.vmem_to_hbm [thread:$0]  %s218, 128, %s220, [#allocation4]
    $region49: #{tpu_custom_call.1} parent=1 // pred_fallthru
      _
    // Predicated region
    $region50: #{tpu_custom_call.1} parent=1 // pred_check
      _
    $region51: #{tpu_custom_call.1} parent=1 // pred_check_branch
      %224 = sbr.rel (0) target = $region53
    $region52: #{tpu_custom_call.1} parent=1 // pred_region
      %226 = dma.done [#allocation4], 128
    $region53: #{tpu_custom_call.1} parent=1 // pred_fallthru
      _
    %227 = vsyncpa [#allocation3], 1
    %228 = vsyncpa [#allocation6], 1
    %229 = vsyncpa [#allocation9], 1
    %230 = vsyncpa [#allocation4], 1

</llo_original>
